<compile_context>
chip_gen: v7x
topology: tpu7x:2x2x1
jax: 0.10.0
libtpu: 0.0.40
codegen_flags: <defaults>
</compile_context>

<pallas_src>
import functools

import jax
import jax.numpy as jnp
from jax.experimental import pallas as pl
from jax.experimental.pallas import tpu as pltpu


def _se2_pose_loss_kernel(pred_ref, targ_ref, out_ref, acc_ref, *, rg):
    """One (tile_rows, 384) lane-dense block; columns cycle [x, y, theta]."""
    i = pl.program_id(1)

    @pl.when(i == 0)
    def _init():
        acc_ref[...] = jnp.zeros_like(acc_ref)

    diff = pred_ref[...].astype(jnp.float32) - targ_ref[...].astype(jnp.float32)
    # Sublane-direction partial sum into the resident per-lane accumulator:
    # pure VPU adds per step; no cross-lane XLU reduce, no scalar store.
    acc_ref[...] += jnp.sum(diff * diff, axis=0, keepdims=True)

    @pl.when(i == pl.num_programs(1) - 1)
    def _finalize():
        # Static lane weight: column % 3 == 2 holds theta (weight rg), the
        # x/y columns get weight 1.  Applied once per core at the very end.
        col = jax.lax.broadcasted_iota(jnp.int32, acc_ref.shape, 1)
        w = jnp.where(col % 3 == 2, jnp.float32(rg), jnp.float32(1.0))
        out_ref[0] = acc_ref[...] * w


def se2_pose_loss(pose_pred, pose_target, block_width, block_length,
                  *, tile_rows=1024, num_core_splits=2, min_pallas_batch=0):
    """Pallas implementation of SE2PoseLoss.forward.

    pose_pred / pose_target: (B, 3) arrays of [x, y, theta].
    """
    assert pose_pred.shape == pose_target.shape
    b, d = pose_pred.shape
    assert d == 3, "pose must be [x, y, theta]"

    rg = float(((block_length ** 2 + block_width ** 2) / 12.0) ** 0.5)

    if b < min_pallas_batch:
        # Small-batch fallback: one fused XLA expression beats kernel launch
        # overhead for tiny B.
        diff = (pose_pred - pose_target).astype(jnp.float32)
        sq = diff * diff
        return jnp.mean(sq[:, 0]) + jnp.mean(sq[:, 1]) + rg * jnp.mean(sq[:, 2])

    lane_w = 384                      # 3 * 128: one row = 128 contiguous poses.
    n = 3 * b                         # total flat elements per operand
    rows = pl.cdiv(n, lane_w)
    rows8 = pl.cdiv(rows, 8) * 8
    tile_rows = max(8, (tile_rows // 8) * 8)
    tr = max(8, min(tile_rows, rows8))          # multiple of 8 by construction
    super_tile = tr * num_core_splits
    rows_padded = pl.cdiv(rows, super_tile) * super_tile
    n_inner = rows_padded // super_tile

    # Free metadata reshape of the contiguous (B, 3) buffers.
    flat_pred = pose_pred.reshape(-1)
    flat_targ = pose_target.reshape(-1)
    padded_elems = rows_padded * lane_w
    if padded_elems != n:
        # Single contiguous zero pad (no strided transpose); zeros add 0 loss.
        flat_pred = jnp.pad(flat_pred, (0, padded_elems - n))
        flat_targ = jnp.pad(flat_targ, (0, padded_elems - n))
    pred2d = flat_pred.reshape(rows_padded, lane_w)
    targ2d = flat_targ.reshape(rows_padded, lane_w)

    def in_map(c, i):
        return (c * n_inner + i, 0)

    kernel = functools.partial(_se2_pose_loss_kernel, rg=rg)
    partials = pl.pallas_call(
        kernel,
        out_shape=jax.ShapeDtypeStruct((num_core_splits, 1, lane_w), jnp.float32),
        grid=(num_core_splits, n_inner),
        in_specs=[
            pl.BlockSpec((tr, lane_w), in_map),
            pl.BlockSpec((tr, lane_w), in_map),
        ],
        out_specs=pl.BlockSpec((1, 1, lane_w), lambda c, i: (c, 0, 0)),
        scratch_shapes=[pltpu.VMEM((1, lane_w), jnp.float32)],
        compiler_params=pltpu.CompilerParams(
            dimension_semantics=("parallel", "arbitrary")),
    )(pred2d, targ2d)

    # Tiny (2*384-element) cross-lane reduce + 1/B scale; padded lanes are 0.
    return jnp.sum(partials) / b


def _reference_loss(pose_pred, pose_target, block_width, block_length):
    rg = ((block_length ** 2 + block_width ** 2) / 12.0) ** 0.5
    mse = lambda a, b: jnp.mean((a - b) ** 2)
    return (mse(pose_pred[:, 0], pose_target[:, 0])
            + mse(pose_pred[:, 1], pose_target[:, 1])
            + rg * mse(pose_pred[:, 2], pose_target[:, 2]))


if __name__ == "__main__":
    block_width = 0.1
    block_length = 0.5

    key = jax.random.PRNGKey(0)
    k1, k2, k3, k4, k5, k6 = jax.random.split(key, 6)

    # Small batch: single tile per core, heavy zero padding of the flat buffer.
    b1 = 8
    pred1 = jax.random.normal(k1, (b1, 3), dtype=jnp.float32)
    targ1 = jax.random.normal(k2, (b1, 3), dtype=jnp.float32)
    loss1 = jax.block_until_ready(
        se2_pose_loss(pred1, targ1, block_width, block_length))
    ref1 = _reference_loss(pred1, targ1, block_width, block_length)
    assert jnp.allclose(loss1, ref1, rtol=1e-5, atol=1e-5), (loss1, ref1)

    # Non-multiple-of-128 batch with a tiny tile: exercises the contiguous zero
    # pad, the two-way core split and multi-step accumulation (n_inner > 1).
    b2 = 4000
    pred2 = jax.random.normal(k3, (b2, 3), dtype=jnp.float32)
    targ2 = jax.random.normal(k4, (b2, 3), dtype=jnp.float32)
    loss2 = jax.block_until_ready(
        se2_pose_loss(pred2, targ2, block_width, block_length, tile_rows=8))
    ref2 = _reference_loss(pred2, targ2, block_width, block_length)
    assert jnp.allclose(loss2, ref2, rtol=1e-5, atol=1e-5), (loss2, ref2)

    # Default (large) tile path on a mid-size batch.
    b3 = 300
    pred3 = jax.random.normal(k5, (b3, 3), dtype=jnp.float32)
    targ3 = jax.random.normal(k6, (b3, 3), dtype=jnp.float32)
    loss3 = jax.block_until_ready(
        se2_pose_loss(pred3, targ3, block_width, block_length))
    ref3 = _reference_loss(pred3, targ3, block_width, block_length)
    assert jnp.allclose(loss3, ref3, rtol=1e-5, atol=1e-5), (loss3, ref3)

    # Small-batch XLA fallback code path (no pallas_call).
    loss_fb = jax.block_until_ready(
        se2_pose_loss(pred1, targ1, block_width, block_length,
                      min_pallas_batch=1024))
    assert jnp.allclose(loss_fb, ref1, rtol=1e-5, atol=1e-5), (loss_fb, ref1)

    print("KERNEL_OK")
</pallas_src>

<mosaic_0001>
module attributes {stable_mosaic.version = 11 : i64} {
  func.func @_se2_pose_loss_kernel(%arg0: i32, %arg1: i32, %arg2: memref<8x384xf32, #tpu.memory_space<vmem>>, %arg3: memref<8x384xf32, #tpu.memory_space<vmem>>, %arg4: memref<1x1x384xf32, #tpu.memory_space<vmem>>, %arg5: memref<1x384xf32, #tpu.memory_space<vmem>>) attributes {dimension_semantics = [#tpu.dimension_semantics<parallel>, #tpu.dimension_semantics<arbitrary>], iteration_bounds = array<i64: 2, 1>, scalar_prefetch = 0 : i64, scratch_operands = 1 : i64, tpu.core_type = #tpu.core_type<tc>, window_params = [{transform_indices = @transform_0, window_bounds = array<i64: 8, 384>}, {transform_indices = @transform_1, window_bounds = array<i64: 8, 384>}, {transform_indices = @transform_2, window_bounds = array<i64: 1, 1, 384>}]} {
    %c0_i32 = arith.constant 0 : i32
    %0 = arith.cmpi eq, %arg1, %c0_i32 : i32
    %1 = arith.extui %0 : i1 to i32
    %c0_i32_0 = arith.constant 0 : i32
    %2 = arith.cmpi ne, %1, %c0_i32_0 : i32
    scf.if %2 {
      %cst_10 = arith.constant 0.000000e+00 : f32
      %15 = vector.broadcast %cst_10 : f32 to vector<1x384xf32>
      %c0_11 = arith.constant 0 : index
      %c0_12 = arith.constant 0 : index
      %16 = vector.load %arg5[%c0_11, %c0_12] : memref<1x384xf32, #tpu.memory_space<vmem>>, vector<1x384xf32>
      tpu.vector_store %arg5[%c0_11, %c0_12], %15 {strides = array<i32>} : memref<1x384xf32, #tpu.memory_space<vmem>>, vector<1x384xf32>,
    } else {
    }
    %c0 = arith.constant 0 : index
    %c0_1 = arith.constant 0 : index
    %3 = vector.load %arg2[%c0, %c0_1] : memref<8x384xf32, #tpu.memory_space<vmem>>, vector<8x384xf32>
    %c0_2 = arith.constant 0 : index
    %c0_3 = arith.constant 0 : index
    %4 = vector.load %arg3[%c0_2, %c0_3] : memref<8x384xf32, #tpu.memory_space<vmem>>, vector<8x384xf32>
    %5 = arith.subf %3, %4 : vector<8x384xf32>
    %c0_4 = arith.constant 0 : index
    %c0_5 = arith.constant 0 : index
    %6 = vector.load %arg5[%c0_4, %c0_5] : memref<1x384xf32, #tpu.memory_space<vmem>>, vector<1x384xf32>
    %7 = arith.mulf %5, %5 : vector<8x384xf32>
    %cst = arith.constant dense<0.000000e+00> : vector<384xf32>
    %8 = vector.multi_reduction <add>, %7, %cst [0] : vector<8x384xf32> to vector<384xf32>
    %9 = vector.shape_cast %8 : vector<384xf32> to vector<1x384xf32>
    %10 = arith.addf %6, %9 : vector<1x384xf32>
    %c0_6 = arith.constant 0 : index
    %c0_7 = arith.constant 0 : index
    %11 = vector.load %arg5[%c0_6, %c0_7] : memref<1x384xf32, #tpu.memory_space<vmem>>, vector<1x384xf32>
    tpu.vector_store %arg5[%c0_6, %c0_7], %10 {strides = array<i32>} : memref<1x384xf32, #tpu.memory_space<vmem>>, vector<1x384xf32>,
    %c0_i32_8 = arith.constant 0 : i32
    %12 = arith.cmpi eq, %arg1, %c0_i32_8 : i32
    %13 = arith.extui %12 : i1 to i32
    %c0_i32_9 = arith.constant 0 : i32
    %14 = arith.cmpi ne, %13, %c0_i32_9 : i32
    scf.if %14 {
      %15 = tpu.iota {dimensions = array<i32: 1>} : vector<1x384xi32>
      %c3_i32 = arith.constant 3 : i32
      %c0_i32_10 = arith.constant 0 : i32
      %16 = arith.cmpi eq, %c3_i32, %c0_i32_10 : i32
      %c1_i32 = arith.constant 1 : i32
      %17 = arith.select %16, %c1_i32, %c3_i32 : i32
      %18 = vector.broadcast %17 : i32 to vector<1x384xi32>
      %19 = arith.remsi %15, %18 : vector<1x384xi32>
      %c0_i32_11 = arith.constant 0 : i32
      %20 = vector.broadcast %c0_i32_11 : i32 to vector<1x384xi32>
      %21 = arith.cmpi ne, %19, %20 : vector<1x384xi32>
      %c0_i32_12 = arith.constant 0 : i32
      %22 = vector.broadcast %c0_i32_12 : i32 to vector<1x384xi32>
      %23 = arith.cmpi slt, %19, %22 : vector<1x384xi32>
      %c0_i32_13 = arith.constant 0 : i32
      %24 = arith.cmpi slt, %17, %c0_i32_13 : i32
      %25 = vector.broadcast %24 : i1 to vector<1x384xi1>
      %26 = vector.broadcast %25 : vector<1x384xi1> to vector<1x384xi1>
      %27 = arith.xori %23, %26 : vector<1x384xi1>
      %28 = arith.andi %27, %21 : vector<1x384xi1>
      %29 = vector.broadcast %17 : i32 to vector<1x384xi32>
      %30 = arith.addi %19, %29 : vector<1x384xi32>
      %31 = arith.select %28, %30, %19 : vector<1x384xi1>, vector<1x384xi32>
      %c2_i32 = arith.constant 2 : i32
      %32 = vector.broadcast %c2_i32 : i32 to vector<1x384xi32>
      %33 = arith.cmpi eq, %31, %32 : vector<1x384xi32>
      %cst_14 = arith.constant 0.14719601 : f32
      %cst_15 = arith.constant 1.000000e+00 : f32
      %34 = vector.broadcast %cst_14 : f32 to vector<1x384xf32>
      %35 = vector.broadcast %cst_15 : f32 to vector<1x384xf32>
      %36 = arith.select %33, %34, %35 : vector<1x384xi1>, vector<1x384xf32>
      %c0_16 = arith.constant 0 : index
      %c0_17 = arith.constant 0 : index
      %37 = vector.load %arg5[%c0_16, %c0_17] : memref<1x384xf32, #tpu.memory_space<vmem>>, vector<1x384xf32>
      %38 = arith.mulf %37, %36 : vector<1x384xf32>
      %c0_18 = arith.constant 0 : index
      %c0_19 = arith.constant 0 : index
      %c0_20 = arith.constant 0 : index
      %39 = vector.load %arg4[%c0_18, %c0_19, %c0_20] : memref<1x1x384xf32, #tpu.memory_space<vmem>>, vector<1x1x384xf32>
      %40 = vector.shape_cast %39 : vector<1x1x384xf32> to vector<1x384xf32>
      %41 = vector.shape_cast %38 : vector<1x384xf32> to vector<1x1x384xf32>
      tpu.vector_store %arg4[%c0_18, %c0_19, %c0_20], %41 {strides = array<i32>} : memref<1x1x384xf32, #tpu.memory_space<vmem>>, vector<1x1x384xf32>,
    } else {
    }
    return
  }
  func.func @transform_0(%arg0: i32, %arg1: i32) -> (i32, i32) {
    %c1_i32 = arith.constant 1 : i32
    %0 = arith.muli %arg0, %c1_i32 : i32
    %1 = arith.addi %0, %arg1 : i32
    %c0_i32 = arith.constant 0 : i32
    %c0_i32_0 = arith.constant 0 : i32
    return %1, %c0_i32 : i32, i32
  }
  func.func @transform_1(%arg0: i32, %arg1: i32) -> (i32, i32) {
    %c1_i32 = arith.constant 1 : i32
    %0 = arith.muli %arg0, %c1_i32 : i32
    %1 = arith.addi %0, %arg1 : i32
    %c0_i32 = arith.constant 0 : i32
    %c0_i32_0 = arith.constant 0 : i32
    return %1, %c0_i32 : i32, i32
  }
  func.func @transform_2(%arg0: i32, %arg1: i32) -> (i32, i32, i32) {
    %c0_i32 = arith.constant 0 : i32
    %c0_i32_0 = arith.constant 0 : i32
    %c0_i32_1 = arith.constant 0 : i32
    return %arg0, %c0_i32, %c0_i32_0 : i32, i32, i32
  }
}

</mosaic_0001>

<llo_original>
// kernel: tpu_custom_call.1
$region0: #{tpu_custom_call.1}
  #allocation0 [shape = 'u32[]', space=smem, size = 0x4, offset = 0x4, fixed_abs, tag = 'smem constant byte address 0x4 - core index']
  #allocation1 [shape = 'u32[144,128]{1,0:T(1,128)}', space=vmem, size = 0x12000, scoped, tag = 'internal scratch']
  #allocation2 [shape = 'f32[1,384]{1,0:T(1,128)}', space=vmem, size = 0x600, scoped, tag = 'scratch operand']
  %s0 = inlined_call_operand.hbm [shape: f32[16,384], index: 0, kind: input, shape index: {}]
  %s1 = inlined_call_operand.hbm [shape: f32[16,384], index: 1, kind: input, shape index: {}]
  %s2 = inlined_call_operand.hbm [shape: f32[2,1,384], index: 2, kind: output, shape index: {}]
  %s3 = sld [smem:[#allocation0]]
  $region57: #{tpu_custom_call.1} parent=0
    _
  %s5 = ssub.s32 1, %s3
  %s6 = scalar_select 0, %s5, %s3
  $region1: #{tpu_custom_call.1} parent=0
    #allocation3 [shape = 'u8[24576]{0}', space=vmem, size = 0x6000, scoped, tag = 'input window, operand 0']
    #allocation4 [shape = 's32[2]{0}', space=sflag, size = 0x8, scoped, tag = 'scoped memory for tpu_custom_call.1']
    #allocation5 [shape = 's32[2]{0}', space=sflag, size = 0x8, scoped, tag = 'scoped memory for tpu_custom_call.1']
    #allocation6 [shape = 'u8[24576]{0}', space=vmem, size = 0x6000, scoped, tag = 'input window, operand 1']
    #allocation7 [shape = 's32[2]{0}', space=sflag, size = 0x8, scoped, tag = 'scoped memory for tpu_custom_call.1']
    #allocation8 [shape = 'u8[3072]{0}', space=vmem, size = 0xc00, scoped, tag = 'output window, operand 0']
    %7 = vsyncpa [#allocation4], 0
    %s8 = scalar_lea.sflag [#allocation4], 1
    %9 = vsyncpa %s8, 0
    %10 = vsyncpa [#allocation7], 0
    %s11 = scalar_lea.sflag [#allocation7], 1
    %12 = vsyncpa %s11, 0
    %13 = vsyncpa [#allocation5], 0
    %s14 = scalar_lea.sflag [#allocation5], 1
    %15 = vsyncpa %s14, 0
    loop: start=0, step=1, limit=4
    $region2: #{tpu_custom_call.1} parent=1 // loop_pre_header
      _
    $region3: #{tpu_custom_call.1} parent=1 // loop_header
      %s17 = sphi 0, %s21
      %p18 = scmp.ge.s32.totalorder %s17, 4
      %s24 = sphi 0, %s36
      %s25 = sphi 0, %s32
      %s26 = sphi 0, %s24
      %s27 = sphi 0, %s25
      %s28 = sphi 0, %s26
      %s29 = sphi 0, %s27
      %s41 = sphi 0, %s43
      %s44 = sphi 0, %s41
      %s45 = sphi 0, %s44
      %s61 = sphi 0, %s45
      %s69 = sphi 0, %s71
      %s72 = sphi 0, %s69
      %s73 = sphi 0, %s72
      %s89 = sphi 0, %s73
      %s95 = sphi 0, %s97
      %s98 = sphi 0, %s95
      %s99 = sphi 0, %s98
      %s115 = sphi 0, %s99
    $region4: #{tpu_custom_call.1} parent=1 // loop_header_branch
      %20 = sbr.rel (%p18) target = $region8
    $region5: #{tpu_custom_call.1} parent=1 // loop_body
      %s22 = ssub.s32 %s17, 1
      %s23 = ssub.s32 %s17, 2
      %s30 = sadd.s32 1, %s25
      %p31 = scmp.ge.s32.totalorder %s30, 1
      %s32 = scalar_select %p31, 0, %s30
      %s33 = sadd.s32 1, %s24
      %s34 = scalar_select %p31, %s33, %s24
      %p35 = scmp.ge.s32.totalorder %s34, 2
      %s36 = scalar_select %p35, 0, %s34
      %s37 = sadd.s32 %s24, %s25
      %s38 = sadd.s32 %s36, %s32
      %s39 = ssub.s32 %s37, %s38
      %p40 = scmp.eq.s32.totalorder %s39, 0
      %s42 = sadd.s32 %s41, 1
      %s43 = scalar_select %p40, %s41, %s42
      %p46 = pneg %p40
      %p47 = scmp.eq.s32.totalorder %s17, 1
      %p48 = por %p46, %p47
      %p49 = scmp.ne.s32.totalorder %s41, %s44
      %p50 = scmp.eq.s32.totalorder %s17, 0
      %p51 = por %p49, %p50
      %p52 = scmp.ne.s32.totalorder %s41, %s44
      %p53 = scmp.eq.s32.totalorder %s22, 1
      %p54 = por %p52, %p53
      %p55 = scmp.ne.s32.totalorder %s44, %s45
      %p56 = scmp.eq.s32.totalorder %s22, 0
      %p57 = por %p55, %p56
      %p58 = scmp.ne.s32.totalorder %s44, %s45
      %p59 = scmp.eq.s32.totalorder %s23, 1
      %p60 = por %p58, %p59
      %p62 = scmp.ne.s32.totalorder %s45, %s61
      %p63 = scmp.eq.s32.totalorder %s23, 0
      %p64 = por %p62, %p63
      %s65 = sadd.s32 %s24, %s25
      %s66 = sadd.s32 %s36, %s32
      %s67 = ssub.s32 %s65, %s66
      %p68 = scmp.eq.s32.totalorder %s67, 0
      %s70 = sadd.s32 %s69, 1
      %s71 = scalar_select %p68, %s69, %s70
      %p74 = pneg %p68
      %p75 = scmp.eq.s32.totalorder %s17, 1
      %p76 = por %p74, %p75
      %p77 = scmp.ne.s32.totalorder %s69, %s72
      %p78 = scmp.eq.s32.totalorder %s17, 0
      %p79 = por %p77, %p78
      %p80 = scmp.ne.s32.totalorder %s69, %s72
      %p81 = scmp.eq.s32.totalorder %s22, 1
      %p82 = por %p80, %p81
      %p83 = scmp.ne.s32.totalorder %s72, %s73
      %p84 = scmp.eq.s32.totalorder %s22, 0
      %p85 = por %p83, %p84
      %p86 = scmp.ne.s32.totalorder %s72, %s73
      %p87 = scmp.eq.s32.totalorder %s23, 1
      %p88 = por %p86, %p87
      %p90 = scmp.ne.s32.totalorder %s73, %s89
      %p91 = scmp.eq.s32.totalorder %s23, 0
      %p92 = por %p90, %p91
      %s93 = ssub.s32 %s24, %s36
      %p94 = scmp.eq.s32.totalorder %s93, 0
      %s96 = sadd.s32 %s95, 1
      %s97 = scalar_select %p94, %s95, %s96
      %p100 = pneg %p94
      %p101 = scmp.eq.s32.totalorder %s17, 1
      %p102 = por %p100, %p101
      %p103 = scmp.ne.s32.totalorder %s95, %s98
      %p104 = scmp.eq.s32.totalorder %s17, 0
      %p105 = por %p103, %p104
      %p106 = scmp.ne.s32.totalorder %s95, %s98
      %p107 = scmp.eq.s32.totalorder %s22, 1
      %p108 = por %p106, %p107
      %p109 = scmp.ne.s32.totalorder %s98, %s99
      %p110 = scmp.eq.s32.totalorder %s22, 0
      %p111 = por %p109, %p110
      %p112 = scmp.ne.s32.totalorder %s98, %s99
      %p113 = scmp.eq.s32.totalorder %s23, 1
      %p114 = por %p112, %p113
      %p116 = scmp.ne.s32.totalorder %s99, %s115
      %p117 = scmp.eq.s32.totalorder %s23, 0
      %p118 = por %p116, %p117
      %p119 = scmp.le.s32.totalorder 1, %s17
      %p120 = scmp.lt.s32.totalorder %s17, 3
      %p121 = pnand %p119, %p120
      %p122 = pneg %p121
      // Predicated region
      $region9: #{tpu_custom_call.1} parent=5 // pred_check
        _
      $region10: #{tpu_custom_call.1} parent=5 // pred_check_branch
        %124 = sbr.rel (%p121) target = $region12
      $region11: #{tpu_custom_call.1} parent=5 // pred_region
        %s125 = ssub.s32 %s17, 1
      $region12: #{tpu_custom_call.1} parent=5 // pred_fallthru
        _
      %p126 = scmp.lt.s32.totalorder %s17, 2
      // Predicated region
      $region13: #{tpu_custom_call.1} parent=5 // pred_check
        %p127 = pneg %p126
      $region14: #{tpu_custom_call.1} parent=5 // pred_check_branch
        %129 = sbr.rel (%p127) target = $region16
      $region15: #{tpu_custom_call.1} parent=5 // pred_region
        // Predicated region
        $region17: #{tpu_custom_call.1} parent=15 // pred_check
          %p130 = pneg %p51
        $region18: #{tpu_custom_call.1} parent=15 // pred_check_branch
          %132 = sbr.rel (%p130) target = $region20
        $region19: #{tpu_custom_call.1} parent=15 // pred_region
          %s133 = sand.u32 %s41, 1
          %s134 = scalar_lea.sflag [#allocation4], %s133
          %s135 = sand.u32 %s41, 1
          %s136 = smul.addr %s135, 24
          %s137 = scalar_lea.vmem [#allocation3], %s136
          %s138 = sadd.s32 %s24, %s25
          %s140 = ssub.s32 384, 384
          %141 = vsyncadd %s134, %s140
          %s142 = smul.addr %s138, 3
          %s143 = smul.addr %s142, 128
          %s144 = scalar_lea.hbm %s0, %s143
          %s146 = sshll.u32 %s137, 4
          %s147 = int_to_ptr.vmem [resolvable:$true] %s146
          %149 = dma.hbm_to_vmem [thread:$0]  %s144, 384, %s147, %s134
        $region20: #{tpu_custom_call.1} parent=15 // pred_fallthru
          _
        // Predicated region
        $region21: #{tpu_custom_call.1} parent=15 // pred_check
          %p150 = pneg %p79
        $region22: #{tpu_custom_call.1} parent=15 // pred_check_branch
          %152 = sbr.rel (%p150) target = $region24
        $region23: #{tpu_custom_call.1} parent=15 // pred_region
          %s153 = sand.u32 %s69, 1
          %s154 = scalar_lea.sflag [#allocation7], %s153
          %s155 = sand.u32 %s69, 1
          %s156 = smul.addr %s155, 24
          %s157 = scalar_lea.vmem [#allocation6], %s156
          %s158 = sadd.s32 %s24, %s25
          %s160 = ssub.s32 384, 384
          %161 = vsyncadd %s154, %s160
          %s162 = smul.addr %s158, 3
          %s163 = smul.addr %s162, 128
          %s164 = scalar_lea.hbm %s1, %s163
          %s166 = sshll.u32 %s157, 4
          %s167 = int_to_ptr.vmem [resolvable:$true] %s166
          %169 = dma.hbm_to_vmem [thread:$0]  %s164, 384, %s167, %s154
        $region24: #{tpu_custom_call.1} parent=15 // pred_fallthru
          _
      $region16: #{tpu_custom_call.1} parent=5 // pred_fallthru
        _
      %p170 = scmp.le.s32.totalorder 1, %s17
      %p171 = scmp.lt.s32.totalorder %s17, 3
      %p172 = pnand %p170, %p171
      %p173 = pneg %p172
      // Predicated region
      $region25: #{tpu_custom_call.1} parent=5 // pred_check
        _
      $region26: #{tpu_custom_call.1} parent=5 // pred_check_branch
        %175 = sbr.rel (%p172) target = $region28
      $region27: #{tpu_custom_call.1} parent=5 // pred_region
        %s176 = ssub.s32 %s17, 1
        %s177 = sand.u32 %s44, 1
        %s178 = scalar_lea.sflag [#allocation4], %s177
        %s179 = sand.u32 %s44, 1
        %s180 = smul.addr %s179, 24
        %s181 = scalar_lea.vmem [#allocation3], %s180
        // Predicated region
        $region29: #{tpu_custom_call.1} parent=27 // pred_check
          %p182 = pneg %p57
        $region30: #{tpu_custom_call.1} parent=27 // pred_check_branch
          %184 = sbr.rel (%p182) target = $region32
        $region31: #{tpu_custom_call.1} parent=27 // pred_region
          %185 = dma.done %s178, 384
        $region32: #{tpu_custom_call.1} parent=27 // pred_fallthru
          _
        %s186 = sand.u32 %s72, 1
        %s187 = scalar_lea.sflag [#allocation7], %s186
        %s188 = sand.u32 %s72, 1
        %s189 = smul.addr %s188, 24
        %s190 = scalar_lea.vmem [#allocation6], %s189
        // Predicated region
        $region33: #{tpu_custom_call.1} parent=27 // pred_check
          %p191 = pneg %p85
        $region34: #{tpu_custom_call.1} parent=27 // pred_check_branch
          %193 = sbr.rel (%p191) target = $region36
        $region35: #{tpu_custom_call.1} parent=27 // pred_region
          %194 = dma.done %s187, 384
        $region36: #{tpu_custom_call.1} parent=27 // pred_fallthru
          _
        %s195 = sand.u32 %s44, 1
        %s196 = scalar_lea.sflag [#allocation4], %s195
        %s197 = sand.u32 %s44, 1
        %s198 = smul.addr %s197, 24
        %s199 = scalar_lea.vmem [#allocation3], %s198
        %p200 = pneg %p57
        %p201 = pneg %p54
        %s202 = sand.u32 %s72, 1
        %s203 = scalar_lea.sflag [#allocation7], %s202
        %s204 = sand.u32 %s72, 1
        %s205 = smul.addr %s204, 24
        %s206 = scalar_lea.vmem [#allocation6], %s205
        %p207 = pneg %p85
        %p208 = pneg %p82
        %p209 = pneg %p111
        %p210 = pneg %p108
        %s211 = sand.u32 %s98, 1
        %s212 = scalar_lea.sflag [#allocation5], %s211
        %s213 = sand.u32 %s98, 1
        %s214 = smul.addr %s213, 3
        %s215 = scalar_lea.vmem [#allocation8], %s214
        %s216 = sadd.s32 %s26, %s27
        %s217 = sadd.s32 %s26, %s27
        %p218 = scmp.eq.s32.totalorder %s27, 0
        // Predicated region
        $region37: #{tpu_custom_call.1} parent=27 // pred_check
          %p219 = pneg %p218
        $region38: #{tpu_custom_call.1} parent=27 // pred_check_branch
          %221 = sbr.rel (%p219) target = $region40
        $region39: #{tpu_custom_call.1} parent=27 // pred_region
          %v222 = vlaneseq
          %vm223 = vcmp.ge.s32.totalorder %v222, 0
          %vm224 = vcmp.lt.s32.totalorder %v222, 384
          %vm225 = vmand %vm223, %vm224
          %226 = vst.msk [vmem:[#allocation2] sm:$0x7] %vm225, 0.0
        $region40: #{tpu_custom_call.1} parent=27 // pred_fallthru
          _
        %v227 = vld [vmem:[%s181] sm:$0xff]
        %v228 = vld [vmem:[%s181 + $0x8] sm:$0xff]
        %v229 = vld [vmem:[%s181 + $0x10] sm:$0xff]
        %v230 = vld [vmem:[%s190] sm:$0xff]
        %v231 = vld [vmem:[%s190 + $0x8] sm:$0xff]
        %v232 = vld [vmem:[%s190 + $0x10] sm:$0xff]
        %v233 = vsub.f32 %v227, %v230
        %v234 = vsub.f32 %v228, %v231
        %v235 = vsub.f32 %v229, %v232
        %v236 = vld [vmem:[#allocation2] sm:$0x7]
        %v237 = vmul.f32 %v233, %v233
        %v238 = vmul.f32 %v234, %v234
        %v239 = vmul.f32 %v235, %v235
        %v240 = vrot.slane %v237, 4
        %v241 = vadd.f32 %v237, %v240
        %v242 = vrot.slane %v241, 2
        %v243 = vadd.f32 %v241, %v242
        %v244 = vrot.slane %v243, 1
        %v245 = vadd.f32 %v243, %v244
        %v246 = vrot.slane %v238, 4
        %v247 = vadd.f32 %v238, %v246
        %v248 = vrot.slane %v247, 2
        %v249 = vadd.f32 %v247, %v248
        %v250 = vrot.slane %v249, 1
        %v251 = vadd.f32 %v249, %v250
        %v252 = vrot.slane %v239, 4
        %v253 = vadd.f32 %v239, %v252
        %v254 = vrot.slane %v253, 2
        %v255 = vadd.f32 %v253, %v254
        %v256 = vrot.slane %v255, 1
        %v257 = vadd.f32 %v255, %v256
        %v261 = vcombine.low %v245, %v251
        %v263 = vunpack.c.l.s4 1966171168
        %v264 = vunpack.c.0.s8 %v263
        %v265 = vlaneseq
        %v266 = vshrl.u32 %v265, 7
        %v267 = vsub.s32 %v264, %v266
        %v268 = vrot.slane %v261, %v267
        %v270 = vunpack.c.l.s4 1966171168
        %v271 = vunpack.c.0.s8 %v270
        %v272 = vlaneseq
        %v273 = vshrl.u32 %v272, 7
        %v274 = vsub.s32 %v271, %v273
        %v275 = vrot.slane %v257, %v274
        %v276 = vcombine.low %v268, %v275
        %v278 = vunpack.c.l.s4 1966171168
        %v279 = vunpack.c.0.s8 %v278
        %v280 = vlaneseq
        %v281 = vshrl.u32 %v280, 7
        %v282 = vsub.s32 %v279, %v281
        %v283 = vrot.slane %v276, %v282
        %v285 = vadd.f32 %v236, %v283
        %v286 = vlaneseq
        %vm287 = vcmp.ge.s32.totalorder %v286, 0
        %vm288 = vcmp.lt.s32.totalorder %v286, 384
        %vm289 = vmand %vm287, %vm288
        %290 = vst.msk [vmem:[#allocation2] sm:$0x7] %vm289, %v285
        // Predicated region
        $region41: #{tpu_custom_call.1} parent=27 // pred_check
          %p291 = pneg %p218
        $region42: #{tpu_custom_call.1} parent=27 // pred_check_branch
          %293 = sbr.rel (%p291) target = $region44
        $region43: #{tpu_custom_call.1} parent=27 // pred_region
          %v294 = vlaneseq
          %v295 = vand.u32 %v294, 127
          %v296 = vadd.s32 %v295, 128
          %v297 = vadd.s32 %v295, 256
          %vm298 = vcmp.lt.s32.totalorder %v295, 0
          %v299 = vsub.s32 0, %v295
          %v300 = vsel %vm298, %v299, %v295
          %v301 = vmul.u32.u64.compose %v300, 2863311531
          %v302 = vextract.low.u32 %v301
          %v303 = vextract.high.u32 %v301
          %v304 = vshrl.u32 %v303, 1
          %v305 = vmul.u32 %v304, 3
          %v306 = vsub.s32 %v300, %v305
          %v307 = vsub.s32 0, %v306
          %v308 = vsel %vm298, %v307, %v306
          %vm309 = vcmp.lt.s32.totalorder %v296, 0
          %v310 = vsub.s32 0, %v296
          %v311 = vsel %vm309, %v310, %v296
          %v312 = vmul.u32.u64.compose %v311, 2863311531
          %v313 = vextract.low.u32 %v312
          %v314 = vextract.high.u32 %v312
          %v315 = vshrl.u32 %v314, 1
          %v316 = vmul.u32 %v315, 3
          %v317 = vsub.s32 %v311, %v316
          %v318 = vsub.s32 0, %v317
          %v319 = vsel %vm309, %v318, %v317
          %vm320 = vcmp.lt.s32.totalorder %v297, 0
          %v321 = vsub.s32 0, %v297
          %v322 = vsel %vm320, %v321, %v297
          %v323 = vmul.u32.u64.compose %v322, 2863311531
          %v324 = vextract.low.u32 %v323
          %v325 = vextract.high.u32 %v323
          %v326 = vshrl.u32 %v325, 1
          %v327 = vmul.u32 %v326, 3
          %v328 = vsub.s32 %v322, %v327
          %v329 = vsub.s32 0, %v328
          %v330 = vsel %vm320, %v329, %v328
          %vm331 = vcmp.ne.s32.totalorder %v308, 0
          %vm332 = vcmp.ne.s32.totalorder %v319, 0
          %vm333 = vcmp.ne.s32.totalorder %v330, 0
          %vm334 = vcmp.lt.s32.totalorder %v308, 0
          %vm335 = vcmp.lt.s32.totalorder %v319, 0
          %vm336 = vcmp.lt.s32.totalorder %v330, 0
          %vm337 = vmand %vm334, %vm331
          %vm338 = vmand %vm335, %vm332
          %vm339 = vmand %vm336, %vm333
          %v340 = vadd.s32 %v308, 3
          %v341 = vadd.s32 %v319, 3
          %v342 = vadd.s32 %v330, 3
          %v343 = vsel %vm337, %v340, %v308
          %v344 = vsel %vm338, %v341, %v319
          %v345 = vsel %vm339, %v342, %v330
          %vm346 = vcmp.eq.s32.totalorder %v343, 2
          %vm347 = vcmp.eq.s32.totalorder %v344, 2
          %vm348 = vcmp.eq.s32.totalorder %v345, 2
          %v349 = vsel %vm346, 0.14719601, 1.0
          %v350 = vsel %vm347, 0.14719601, 1.0
          %v351 = vsel %vm348, 0.14719601, 1.0
          %v352 = vld [vmem:[#allocation2] sm:$0x7]
          %v356 = vcombine.low %v349, %v350
          %v358 = vunpack.c.l.s4 1966171168
          %v359 = vunpack.c.0.s8 %v358
          %v360 = vlaneseq
          %v361 = vshrl.u32 %v360, 7
          %v362 = vsub.s32 %v359, %v361
          %v363 = vrot.slane %v356, %v362
          %v365 = vunpack.c.l.s4 1966171168
          %v366 = vunpack.c.0.s8 %v365
          %v367 = vlaneseq
          %v368 = vshrl.u32 %v367, 7
          %v369 = vsub.s32 %v366, %v368
          %v370 = vrot.slane %v351, %v369
          %v371 = vcombine.low %v363, %v370
          %v373 = vunpack.c.l.s4 1966171168
          %v374 = vunpack.c.0.s8 %v373
          %v375 = vlaneseq
          %v376 = vshrl.u32 %v375, 7
          %v377 = vsub.s32 %v374, %v376
          %v378 = vrot.slane %v371, %v377
          %v380 = vmul.f32 %v352, %v378
          %381 = vst.msk [vmem:[%s215] sm:$0x7] %vm289, %v380
        $region44: #{tpu_custom_call.1} parent=27 // pred_fallthru
          _
        %s382 = sand.u32 %s98, 1
        %s383 = scalar_lea.sflag [#allocation5], %s382
        %s384 = sand.u32 %s98, 1
        %s385 = smul.addr %s384, 3
        %s386 = scalar_lea.vmem [#allocation8], %s385
        // Predicated region
        $region45: #{tpu_custom_call.1} parent=27 // pred_check
          %p387 = pneg %p108
        $region46: #{tpu_custom_call.1} parent=27 // pred_check_branch
          %389 = sbr.rel (%p387) target = $region48
        $region47: #{tpu_custom_call.1} parent=27 // pred_region
          %s391 = ssub.s32 48, 48
          %392 = vsyncadd %s383, %s391
          %s393 = smul.addr %s26, 3
          %s394 = smul.addr %s393, 16
          %s395 = scalar_lea.hbm %s2, %s394
          %s397 = sshll.u32 %s386, 4
          %s398 = int_to_ptr.vmem [resolvable:$true] %s397
          %400 = dma.vmem_to_hbm [thread:$0]  %s398, 48, %s395, %s383
        $region48: #{tpu_custom_call.1} parent=27 // pred_fallthru
          _
      $region28: #{tpu_custom_call.1} parent=5 // pred_fallthru
        _
      %p401 = scmp.le.s32.totalorder 2, %s17
      // Predicated region
      $region49: #{tpu_custom_call.1} parent=5 // pred_check
        %p402 = pneg %p401
      $region50: #{tpu_custom_call.1} parent=5 // pred_check_branch
        %404 = sbr.rel (%p402) target = $region52
      $region51: #{tpu_custom_call.1} parent=5 // pred_region
        %s405 = ssub.s32 %s17, 2
        // Predicated region
        $region53: #{tpu_custom_call.1} parent=51 // pred_check
          %p406 = pneg %p114
        $region54: #{tpu_custom_call.1} parent=51 // pred_check_branch
          %408 = sbr.rel (%p406) target = $region56
        $region55: #{tpu_custom_call.1} parent=51 // pred_region
          %s409 = sand.u32 %s99, 1
          %s410 = scalar_lea.sflag [#allocation5], %s409
          %s411 = sand.u32 %s99, 1
          %s412 = smul.addr %s411, 3
          %s413 = scalar_lea.vmem [#allocation8], %s412
          %414 = dma.done %s410, 48
        $region56: #{tpu_custom_call.1} parent=51 // pred_fallthru
          _
      $region52: #{tpu_custom_call.1} parent=5 // pred_fallthru
        _
    $region6: #{tpu_custom_call.1} parent=1 // loop_footer
      %s21 = sadd.s32 1, %s17
    $region7: #{tpu_custom_call.1} parent=1 // loop_footer_branch
      %16 = sbr.rel target = $region3
    $region8: #{tpu_custom_call.1} parent=1 // loop_exit
      _
    %415 = vsyncpa [#allocation4], 1
    %s416 = scalar_lea.sflag [#allocation4], 1
    %417 = vsyncpa %s416, 1
    %418 = vsyncpa [#allocation7], 1
    %s419 = scalar_lea.sflag [#allocation7], 1
    %420 = vsyncpa %s419, 1
    %421 = vsyncpa [#allocation5], 1
    %s422 = scalar_lea.sflag [#allocation5], 1
    %423 = vsyncpa %s422, 1

</llo_original>
